<compile_context>
chip_gen: v7x
topology: tpu7x:2x2x1
jax: 0.10.0
libtpu: 0.0.40
codegen_flags: <defaults>
</compile_context>

<pallas_src>
import functools

import jax
import jax.numpy as jnp
from jax.experimental import pallas as pl
from jax.experimental.pallas import tpu as pltpu

_SUBLANE = 8
_LANE = 128
# Bytes allowed for the double-buffered streamed input blocks (2 arrays x 2
# pipeline buffers).  16 MiB is safe on v5e/v6e (128 MiB VMEM) and v7x (64 MiB).
_DEFAULT_INPUT_VMEM_BUDGET = 16 * 1024 * 1024


def _choose_tiles(bc, hw, max_block_elems):
    """Pick (row_tile, col_tile) so the streamed input blocks fit the budget."""
    max_block_elems = max(max_block_elems, _SUBLANE * _LANE)
    if bc * hw <= max_block_elems:
        # Whole problem in one block (block dims == full dims -> tiling exempt).
        return bc, hw
    if _SUBLANE * hw <= max_block_elems:
        # Keep the full HW on the lane axis, tile the (B*C) row axis.
        rows = (max_block_elems // hw) // _SUBLANE * _SUBLANE
        rows = max(_SUBLANE, min(rows, (bc // _SUBLANE) * _SUBLANE))
        return rows, hw
    # HW too large for even 8 full rows: tile the lane dimension too.
    rows = bc if bc < _SUBLANE else _SUBLANE
    cols = max(_LANE, (max_block_elems // rows) // _LANE * _LANE)
    return rows, cols


def _make_masked_loss_kernel(loss_type, bc, hw, row_tile, col_tile):
    """Per-block partial sum of mask * elementwise_loss(fake - real)."""
    partial_rows = (bc % row_tile) != 0
    partial_cols = (hw % col_tile) != 0

    def kernel(f_ref, r_ref, m_ref, o_ref):
        diff = f_ref[...].astype(jnp.float32) - r_ref[...].astype(jnp.float32)
        if loss_type == "l1":
            val = jnp.abs(diff)
        else:  # 'mse'
            val = diff * diff
        # mask is (1, col_tile) and broadcasts over the row tile.
        masked = val * m_ref[...]
        # Remainder blocks read out-of-bounds garbage: zero it with NaN-safe
        # selects so no host-side padding of the big tensors is needed.
        if partial_rows:
            rid = (jax.lax.broadcasted_iota(jnp.int32, (row_tile, col_tile), 0)
                   + pl.program_id(0) * row_tile)
            masked = jnp.where(rid < bc, masked, 0.0)
        if partial_cols:
            cid = (jax.lax.broadcasted_iota(jnp.int32, (row_tile, col_tile), 1)
                   + pl.program_id(1) * col_tile)
            masked = jnp.where(cid < hw, masked, 0.0)
        s = jnp.sum(masked)
        # Lane-dense partial: scalar placed at [0, 0] of an (8, 128) tile.
        ri = jax.lax.broadcasted_iota(jnp.int32, (_SUBLANE, _LANE), 0)
        ci = jax.lax.broadcasted_iota(jnp.int32, (_SUBLANE, _LANE), 1)
        part = jnp.where((ri == 0) & (ci == 0), s, jnp.float32(0.0))
        o_ref[...] = part.reshape(1, 1, _SUBLANE, _LANE)

    return kernel


@functools.partial(
    jax.jit,
    static_argnames=("image_size", "crop_width", "loss_type",
                     "input_vmem_budget_bytes"))
def recon_loss(input_fake, input_real, *, image_size, crop_width,
               loss_type="mse",
               input_vmem_budget_bytes=_DEFAULT_INPUT_VMEM_BUDGET):
    assert loss_type in ("l1", "mse")
    B, C, H, W = input_fake.shape
    assert (H, W) == (image_size, image_size)
    bc, hw = B * C, H * W

    # Border mask, matching torch: mask[cw:-cw, cw:-cw] = 0 (cw == 0 -> all ones).
    interior = image_size - 2 * crop_width
    mask2d = jnp.ones((image_size, image_size), jnp.float32)
    if crop_width > 0 and interior > 0:
        mask2d = mask2d.at[crop_width:image_size - crop_width,
                           crop_width:image_size - crop_width].set(0.0)
        n_border = image_size * image_size - interior * interior
    else:
        n_border = image_size * image_size
    mask_flat = mask2d.reshape(1, hw)

    # Copy-free collapse to (B*C, H*W): lanes = spatial (matches mask.view(-1)),
    # sublanes = batch*channel.
    f2d = input_fake.reshape(bc, hw)
    r2d = input_real.reshape(bc, hw)

    bytes_per_elem = 2 * (jnp.dtype(input_fake.dtype).itemsize
                          + jnp.dtype(input_real.dtype).itemsize)
    row_tile, col_tile = _choose_tiles(
        bc, hw, input_vmem_budget_bytes // bytes_per_elem)
    gi = (bc + row_tile - 1) // row_tile
    gj = (hw + col_tile - 1) // col_tile

    vmem_need = (bytes_per_elem * row_tile * col_tile   # f + r, double-buffered
                 + 2 * col_tile * 4                     # mask block, double-buffered
                 + 2 * _SUBLANE * _LANE * 4)            # output block
    vmem_limit = int(min(max(vmem_need + (8 << 20), 32 << 20), 48 << 20))

    partials = pl.pallas_call(
        _make_masked_loss_kernel(loss_type, bc, hw, row_tile, col_tile),
        out_shape=jax.ShapeDtypeStruct((gi, gj, _SUBLANE, _LANE), jnp.float32),
        grid_spec=pltpu.PrefetchScalarGridSpec(
            num_scalar_prefetch=0,
            grid=(gi, gj),
            in_specs=[
                pl.BlockSpec((row_tile, col_tile), lambda i, j: (i, j)),
                pl.BlockSpec((row_tile, col_tile), lambda i, j: (i, j)),
                pl.BlockSpec((1, col_tile), lambda i, j: (0, j)),
            ],
            out_specs=pl.BlockSpec((1, 1, _SUBLANE, _LANE),
                                   lambda i, j: (i, j, 0, 0)),
        ),
        compiler_params=pltpu.CompilerParams(
            dimension_semantics=("parallel", "parallel"),
            vmem_limit_bytes=vmem_limit,
        ),
    )(f2d, r2d, mask_flat)

    # nn.MSELoss / nn.L1Loss are means over all selected elements: B*n_border*C.
    denom = jnp.float32(B * n_border * C)
    return jnp.sum(partials) / denom


def _reference(input_fake, input_real, image_size, crop_width, loss_type):
    mask2d = jnp.ones((image_size, image_size), jnp.float32)
    if crop_width > 0 and image_size - 2 * crop_width > 0:
        mask2d = mask2d.at[crop_width:image_size - crop_width,
                           crop_width:image_size - crop_width].set(0.0)
    sel = mask2d.reshape(-1) == 1.0
    B, C, H, W = input_fake.shape
    f = jnp.transpose(input_fake.reshape(B, C, H * W), (0, 2, 1))[:, sel]
    r = jnp.transpose(input_real.reshape(B, C, H * W), (0, 2, 1))[:, sel]
    d = f - r
    return jnp.mean(jnp.abs(d)) if loss_type == "l1" else jnp.mean(d * d)


if __name__ == "__main__":
    key = jax.random.PRNGKey(0)
    k1, k2, k3, k4 = jax.random.split(key, 4)

    # Small shapes consistent with the module.
    B, C, S, CW = 2, 4, 16, 4
    fake = jax.random.normal(k1, (B, C, S, S), dtype=jnp.float32)
    real = jax.random.normal(k2, (B, C, S, S), dtype=jnp.float32)

    out_mse = jax.block_until_ready(
        recon_loss(fake, real, image_size=S, crop_width=CW, loss_type="mse"))
    ref_mse = _reference(fake, real, S, CW, "mse")
    assert jnp.allclose(out_mse, ref_mse, rtol=1e-5, atol=1e-6), (out_mse, ref_mse)

    out_l1 = jax.block_until_ready(
        recon_loss(fake, real, image_size=S, crop_width=CW, loss_type="l1"))
    ref_l1 = _reference(fake, real, S, CW, "l1")
    assert jnp.allclose(out_l1, ref_l1, rtol=1e-5, atol=1e-6), (out_l1, ref_l1)

    # Exercise the multi-block / remainder-masking path by shrinking the VMEM
    # budget (B*C = 9 does not divide the 8-row tile; lanes tiled to 128).
    B2, C2 = 3, 3
    fake2 = jax.random.normal(k3, (B2, C2, S, S), dtype=jnp.float32)
    real2 = jax.random.normal(k4, (B2, C2, S, S), dtype=jnp.float32)
    out2 = jax.block_until_ready(
        recon_loss(fake2, real2, image_size=S, crop_width=CW, loss_type="mse",
                   input_vmem_budget_bytes=16 * 1024))
    ref2 = _reference(fake2, real2, S, CW, "mse")
    assert jnp.allclose(out2, ref2, rtol=1e-5, atol=1e-6), (out2, ref2)

    print("KERNEL_OK")
</pallas_src>

<mosaic_0001>
module attributes {stable_mosaic.version = 11 : i64} {
  func.func @kernel(%arg0: i32, %arg1: i32, %arg2: memref<8x256xf32, #tpu.memory_space<vmem>>, %arg3: memref<8x256xf32, #tpu.memory_space<vmem>>, %arg4: memref<1x256xf32, #tpu.memory_space<vmem>>, %arg5: memref<1x1x8x128xf32, #tpu.memory_space<vmem>>) attributes {dimension_semantics = [#tpu.dimension_semantics<parallel>, #tpu.dimension_semantics<parallel>], iteration_bounds = array<i64: 1, 1>, scalar_prefetch = 0 : i64, scratch_operands = 0 : i64, tpu.core_type = #tpu.core_type<tc>, window_params = [{transform_indices = @transform_0, window_bounds = array<i64: 8, 256>}, {transform_indices = @transform_1, window_bounds = array<i64: 8, 256>}, {transform_indices = @transform_2, window_bounds = array<i64: 1, 256>}, {transform_indices = @transform_3, window_bounds = array<i64: 1, 1, 8, 128>}]} {
    %c0 = arith.constant 0 : index
    %c0_0 = arith.constant 0 : index
    %0 = vector.load %arg2[%c0, %c0_0] : memref<8x256xf32, #tpu.memory_space<vmem>>, vector<8x256xf32>
    %c0_1 = arith.constant 0 : index
    %c0_2 = arith.constant 0 : index
    %1 = vector.load %arg3[%c0_1, %c0_2] : memref<8x256xf32, #tpu.memory_space<vmem>>, vector<8x256xf32>
    %2 = arith.subf %0, %1 : vector<8x256xf32>
    %3 = arith.mulf %2, %2 : vector<8x256xf32>
    %c0_3 = arith.constant 0 : index
    %c0_4 = arith.constant 0 : index
    %4 = vector.load %arg4[%c0_3, %c0_4] : memref<1x256xf32, #tpu.memory_space<vmem>>, vector<1x256xf32>
    %5 = vector.broadcast %4 : vector<1x256xf32> to vector<8x256xf32>
    %6 = arith.mulf %3, %5 : vector<8x256xf32>
    %7 = vector.shape_cast %6 : vector<8x256xf32> to vector<1x8x256xf32>
    %cst = arith.constant dense<0.000000e+00> : vector<1xf32>
    %8 = vector.multi_reduction <add>, %7, %cst [1, 2] : vector<1x8x256xf32> to vector<1xf32>
    %9 = vector.shape_cast %8 : vector<1xf32> to vector<1x1x1xf32>
    %10 = vector.extract %9[0, 0, 0] : f32 from vector<1x1x1xf32>
    %11 = tpu.iota {dimensions = array<i32: 0>} : vector<8x128xi32>
    %12 = tpu.iota {dimensions = array<i32: 1>} : vector<8x128xi32>
    %c0_i32 = arith.constant 0 : i32
    %13 = vector.broadcast %c0_i32 : i32 to vector<8x128xi32>
    %14 = arith.cmpi eq, %11, %13 : vector<8x128xi32>
    %c0_i32_5 = arith.constant 0 : i32
    %15 = vector.broadcast %c0_i32_5 : i32 to vector<8x128xi32>
    %16 = arith.cmpi eq, %12, %15 : vector<8x128xi32>
    %17 = arith.andi %14, %16 : vector<8x128xi1>
    %cst_6 = arith.constant 0.000000e+00 : f32
    %18 = vector.broadcast %10 : f32 to vector<8x128xf32>
    %19 = vector.broadcast %cst_6 : f32 to vector<8x128xf32>
    %20 = arith.select %17, %18, %19 : vector<8x128xi1>, vector<8x128xf32>
    %21 = vector.shape_cast %20 : vector<8x128xf32> to vector<1x1x8x128xf32>
    %c0_7 = arith.constant 0 : index
    %c0_8 = arith.constant 0 : index
    %c0_9 = arith.constant 0 : index
    %c0_10 = arith.constant 0 : index
    %22 = vector.load %arg5[%c0_7, %c0_8, %c0_9, %c0_10] : memref<1x1x8x128xf32, #tpu.memory_space<vmem>>, vector<1x1x8x128xf32>
    tpu.vector_store %arg5[%c0_7, %c0_8, %c0_9, %c0_10], %21 {strides = array<i32>} : memref<1x1x8x128xf32, #tpu.memory_space<vmem>>, vector<1x1x8x128xf32>,
    return
  }
  func.func @transform_0(%arg0: i32, %arg1: i32) -> (i32, i32) {
    %c0_i32 = arith.constant 0 : i32
    return %arg0, %arg1 : i32, i32
  }
  func.func @transform_1(%arg0: i32, %arg1: i32) -> (i32, i32) {
    %c0_i32 = arith.constant 0 : i32
    return %arg0, %arg1 : i32, i32
  }
  func.func @transform_2(%arg0: i32, %arg1: i32) -> (i32, i32) {
    %c0_i32 = arith.constant 0 : i32
    %c0_i32_0 = arith.constant 0 : i32
    return %c0_i32, %arg1 : i32, i32
  }
  func.func @transform_3(%arg0: i32, %arg1: i32) -> (i32, i32, i32, i32) {
    %c0_i32 = arith.constant 0 : i32
    %c0_i32_0 = arith.constant 0 : i32
    %c0_i32_1 = arith.constant 0 : i32
    return %arg0, %arg1, %c0_i32, %c0_i32_0 : i32, i32, i32, i32
  }
}

</mosaic_0001>

<llo_original>
// kernel: recon_loss.1
$region0: #{recon_loss.1}
  #allocation0 [shape = 'u32[]', space=smem, size = 0x4, offset = 0x4, fixed_abs, tag = 'smem constant byte address 0x4 - core index']
  #allocation1 [shape = 'u32[144,128]{1,0:T(1,128)}', space=vmem, size = 0x12000, scoped, tag = 'internal scratch']
  %s0 = inlined_call_operand.vmem [shape: f32[8,256], index: 0, kind: input, shape index: {}]
  %s1 = inlined_call_operand.vmem [shape: f32[8,256], index: 1, kind: input, shape index: {}]
  %s2 = inlined_call_operand.vmem [shape: f32[1,256], index: 2, kind: input, shape index: {}]
  %s3 = inlined_call_operand.vmem [shape: f32[1,1,8,128], index: 3, kind: output, shape index: {}]
  %s4 = sld [smem:[#allocation0]]
  $region22: #{recon_loss.1} parent=0
    _
  %s6 = ssub.s32 1, %s4
  %s7 = scalar_select 0, %s6, %s4
  // Predicated region
  $region2: #{recon_loss.1} parent=0 // pred_check
    _
  $region3: #{recon_loss.1} parent=0 // pred_check_branch
    %9 = sbr.rel (0) target = $region5
  $region4: #{recon_loss.1} parent=0 // pred_region
    _
  $region5: #{recon_loss.1} parent=0 // pred_fallthru
    _
  // Predicated region
  $region6: #{recon_loss.1} parent=0 // pred_check
    _
  $region7: #{recon_loss.1} parent=0 // pred_check_branch
    %11 = sbr.rel (0) target = $region9
  $region8: #{recon_loss.1} parent=0 // pred_region
    _
  $region9: #{recon_loss.1} parent=0 // pred_fallthru
    _
  // Predicated region
  $region10: #{recon_loss.1} parent=0 // pred_check
    _
  $region11: #{recon_loss.1} parent=0 // pred_check_branch
    %13 = sbr.rel (0) target = $region13
  $region12: #{recon_loss.1} parent=0 // pred_region
    _
  $region13: #{recon_loss.1} parent=0 // pred_fallthru
    _
  %v14 = vld [vmem:[%s0] sm:$0xff]
  %v15 = vld [vmem:[%s0 + $0x8] sm:$0xff]
  %v16 = vld [vmem:[%s1] sm:$0xff]
  %v17 = vld [vmem:[%s1 + $0x8] sm:$0xff]
  %v18 = vsub.f32 %v14, %v16
  %v19 = vsub.f32 %v15, %v17
  %v20 = vmul.f32 %v18, %v18
  %v21 = vmul.f32 %v19, %v19
  %v22 = vld [vmem:[%s2] sm:$0x3]
  %v24 = vlaneseq
  %v25 = vshrl.u32 %v24, 7
  %v26 = vsub.s32 0, %v25
  %v27 = vrot.slane %v22, %v26
  %v28 = vlaneseq
  %v29 = vshrl.u32 %v28, 7
  %v30 = vsub.s32 1, %v29
  %v31 = vrot.slane %v22, %v30
  %v34 = vmul.f32 %v20, %v27
  %v35 = vmul.f32 %v21, %v31
  %v36 = vadd.f32 %v34, %v35
  %37 = vadd.xlane.f32.xlu0 %v36
  %v38 = vpop.xlane.xlu0 %37
  %v39 = vrot.slane %v38, 4
  %v40 = vadd.f32 %v38, %v39
  %v41 = vrot.slane %v40, 2
  %v42 = vadd.f32 %v40, %v41
  %v43 = vrot.slane %v42, 1
  %v44 = vadd.f32 %v42, %v43
  %s45 = vtos %v44
  %v46 = vlaneseq
  %v47 = vshrl.u32 %v46, 7
  %v48 = vlaneseq
  %v49 = vand.u32 %v48, 127
  %vm50 = vcmp.eq.s32.totalorder %v47, 0
  %vm51 = vcmp.eq.s32.totalorder %v49, 0
  %vm52 = vmand %vm50, %vm51
  %v53 = vstv %s45
  %v54 = vsel %vm52, %v53, 0.0
  %55 = vst [vmem:[%s3] sm:$0xff] %v54
  // Predicated region
  $region14: #{recon_loss.1} parent=0 // pred_check
    _
  $region15: #{recon_loss.1} parent=0 // pred_check_branch
    %57 = sbr.rel (0) target = $region17
  $region16: #{recon_loss.1} parent=0 // pred_region
    _
  $region17: #{recon_loss.1} parent=0 // pred_fallthru
    _
  // Predicated region
  $region18: #{recon_loss.1} parent=0 // pred_check
    _
  $region19: #{recon_loss.1} parent=0 // pred_check_branch
    %59 = sbr.rel (0) target = $region21
  $region20: #{recon_loss.1} parent=0 // pred_region
    _
  $region21: #{recon_loss.1} parent=0 // pred_fallthru
    _

</llo_original>
